<compile_context>
chip_gen: v7x
topology: tpu7x:2x2x1
jax: 0.10.0
libtpu: 0.0.40
codegen_flags: <defaults>
</compile_context>

<pallas_src>
import jax
import jax.numpy as jnp
from jax.experimental import pallas as pl
from jax.experimental.pallas import tpu as pltpu

# ---- problem sizes (small, consistent with the module's forward) ----
B, C, H, W = 2, 4, 16, 16           # input images, NCHW
D = C * H * W                       # flattened backbone feature dim = 1024
CS, CT, CP = 32, 32, 32             # s/t/p concept counts
C_TOTAL = CS + CT + CP              # 96
NUM_CLASSES = 16


def cbm_kernel(feat_ref,        # (B, D)            bf16
               w_proj_ref,      # (C_TOTAL, D)      bf16   (normalization folded in)
               b_proj_ref,      # (1, C_TOTAL)      f32    (-mean/std)
               wg_ref,          # (NUM_CLASSES, C_TOTAL) f32
               bg_ref,          # (1, NUM_CLASSES)  f32
               logits_ref,      # (B, NUM_CLASSES)  f32
               proj_ref):       # (B, C_TOTAL)      f32
    # nn.Linear: y = x @ W.T with W = (out, in)  -> contract last dims (NT).
    dn = (((1,), (1,)), ((), ()))

    # Fused s/t/p projection + normalization: one bf16 MXU matmul + bias add.
    proj = jax.lax.dot_general(feat_ref[...], w_proj_ref[...], dn,
                               preferred_element_type=jnp.float32)
    proj = proj + b_proj_ref[...]                       # (B, C_TOTAL)
    proj_ref[...] = proj                                # single dense write

    # Final classifier: logits = proj @ W_g.T + b_g (tiny, f32).
    logits = jax.lax.dot_general(proj, wg_ref[...], dn,
                                 preferred_element_type=jnp.float32)
    logits_ref[...] = logits + bg_ref[...]              # (B, NUM_CLASSES)


def fuse_params(params):
    """One-time host-side transform of constant parameters.

    proj_c = (feat @ W.T - mean) / std  ==  feat @ (W/std).T + (-mean/std)
    NOTE: must be re-run whenever mean/std change (and assumes std != 0).
    """
    w_cat = jnp.concatenate(
        [params["s_W_c"], params["t_W_c"], params["p_W_c"]], axis=0)      # (96, D)
    mean_cat = jnp.concatenate(
        [params["s_mean"], params["t_mean"], params["p_mean"]], axis=1)   # (1, 96)
    std_cat = jnp.concatenate(
        [params["s_std"], params["t_std"], params["p_std"]], axis=1)      # (1, 96)

    w_proj = (w_cat / std_cat.T).astype(jnp.bfloat16)                     # (96, D)
    b_proj = (-mean_cat / std_cat).astype(jnp.float32)                    # (1, 96)
    return {
        "w_proj": w_proj,
        "b_proj": b_proj,
        "W_g": params["W_g"].astype(jnp.float32),
        "b_g": params["b_g"].astype(jnp.float32),
    }


def cbm_forward(x_nchw, fused):
    """Full forward: (logits, proj_c). x_nchw: (B, C, H, W)."""
    # TODO(synk): the PyTorch backbone_model (clip/cub/vmae/AIM) is an external
    # pretrained network with no clean Pallas equivalent here; using identity
    # backbone + flatten, matching torch.flatten(backbone_out, 1) semantics.
    batch = x_nchw.shape[0]
    feat = x_nchw.reshape(batch, -1).astype(jnp.bfloat16)                 # (B, D)

    vmem = pl.BlockSpec(memory_space=pltpu.MemorySpace.VMEM)

    logits, proj_c = pl.pallas_call(
        cbm_kernel,
        out_shape=(
            jax.ShapeDtypeStruct((batch, NUM_CLASSES), jnp.float32),
            jax.ShapeDtypeStruct((batch, C_TOTAL), jnp.float32),
        ),
        in_specs=[vmem] * 5,
        out_specs=(vmem, vmem),
    )(feat, fused["w_proj"], fused["b_proj"], fused["W_g"], fused["b_g"])
    return logits, proj_c


def cbm_reference(x_nchw, params):
    """Pure-JAX f32 reference (mirrors the PyTorch forward exactly)."""
    feat = x_nchw.reshape(x_nchw.shape[0], -1).astype(jnp.float32)
    s_c = (feat @ params["s_W_c"].T - params["s_mean"]) / params["s_std"]
    t_c = (feat @ params["t_W_c"].T - params["t_mean"]) / params["t_std"]
    p_c = (feat @ params["p_W_c"].T - params["p_mean"]) / params["p_std"]
    proj_c = jnp.concatenate([s_c, t_c, p_c], axis=1)
    logits = proj_c @ params["W_g"].T + params["b_g"]
    return logits, proj_c


def make_params(key):
    ks = jax.random.split(key, 10)
    scale = 0.02
    params = {
        "s_W_c": scale * jax.random.normal(ks[0], (CS, D), jnp.float32),
        "t_W_c": scale * jax.random.normal(ks[1], (CT, D), jnp.float32),
        "p_W_c": scale * jax.random.normal(ks[2], (CP, D), jnp.float32),
        # per-concept projection statistics (kept 2D (1, C) for clean bcast)
        "s_mean": 0.1 * jax.random.normal(ks[3], (1, CS), jnp.float32),
        "s_std": 1.0 + 0.1 * jax.random.uniform(ks[4], (1, CS), jnp.float32),
        "t_mean": 0.1 * jax.random.normal(ks[5], (1, CT), jnp.float32),
        "t_std": 1.0 + 0.1 * jax.random.uniform(ks[6], (1, CT), jnp.float32),
        "p_mean": 0.1 * jax.random.normal(ks[7], (1, CP), jnp.float32),
        "p_std": 1.0 + 0.1 * jax.random.uniform(ks[8], (1, CP), jnp.float32),
        "W_g": scale * jax.random.normal(ks[9], (NUM_CLASSES, C_TOTAL),
                                         jnp.float32),
        "b_g": jnp.linspace(-0.5, 0.5, NUM_CLASSES,
                            dtype=jnp.float32).reshape(1, NUM_CLASSES),
    }
    return params


if __name__ == "__main__":
    key = jax.random.PRNGKey(0)
    k_x, k_p = jax.random.split(key)
    x = jax.random.normal(k_x, (B, C, H, W), jnp.float32)
    params = make_params(k_p)

    fused = jax.block_until_ready(fuse_params(params))   # one-time param prep
    logits, proj_c = jax.block_until_ready(cbm_forward(x, fused))

    ref_logits, ref_proj = cbm_reference(x, params)
    assert logits.shape == (B, NUM_CLASSES) and proj_c.shape == (B, C_TOTAL)
    # bf16 projection weights / features -> loosened tolerances.
    assert jnp.allclose(proj_c, ref_proj, atol=2e-2, rtol=2e-2)
    assert jnp.allclose(logits, ref_logits, atol=2e-2, rtol=2e-2)

    print("KERNEL_OK")
</pallas_src>

<mosaic_0001>
module attributes {stable_mosaic.version = 11 : i64} {
  func.func @cbm_kernel(%arg0: memref<2x1024xbf16, #tpu.memory_space<vmem>>, %arg1: memref<96x1024xbf16, #tpu.memory_space<vmem>>, %arg2: memref<1x96xf32, #tpu.memory_space<vmem>>, %arg3: memref<16x96xf32, #tpu.memory_space<vmem>>, %arg4: memref<1x16xf32, #tpu.memory_space<vmem>>, %arg5: memref<2x16xf32, #tpu.memory_space<vmem>>, %arg6: memref<2x96xf32, #tpu.memory_space<vmem>>) attributes {dimension_semantics = [], scalar_prefetch = 0 : i64, scratch_operands = 0 : i64, tpu.core_type = #tpu.core_type<tc>} {
    %c0 = arith.constant 0 : index
    %c0_0 = arith.constant 0 : index
    %0 = vector.load %arg0[%c0, %c0_0] : memref<2x1024xbf16, #tpu.memory_space<vmem>>, vector<2x1024xbf16>
    %c0_1 = arith.constant 0 : index
    %c0_2 = arith.constant 0 : index
    %1 = vector.load %arg1[%c0_1, %c0_2] : memref<96x1024xbf16, #tpu.memory_space<vmem>>, vector<96x1024xbf16>
    %cst = arith.constant dense<0.000000e+00> : vector<2x96xf32>
    %2 = tpu.matmul %0, %1, %cst {dimension_numbers = #tpu.dot_dimension_numbers<[1], [1], [0], [0], [0, 0, 1, 0], [], []>} : vector<2x1024xbf16>, vector<96x1024xbf16>, vector<2x96xf32> -> vector<2x96xf32>
    %c0_3 = arith.constant 0 : index
    %c0_4 = arith.constant 0 : index
    %3 = vector.load %arg2[%c0_3, %c0_4] : memref<1x96xf32, #tpu.memory_space<vmem>>, vector<1x96xf32>
    %4 = vector.broadcast %3 : vector<1x96xf32> to vector<2x96xf32>
    %5 = arith.addf %2, %4 : vector<2x96xf32>
    %c0_5 = arith.constant 0 : index
    %c0_6 = arith.constant 0 : index
    %6 = vector.load %arg6[%c0_5, %c0_6] : memref<2x96xf32, #tpu.memory_space<vmem>>, vector<2x96xf32>
    tpu.vector_store %arg6[%c0_5, %c0_6], %5 {strides = array<i32>} : memref<2x96xf32, #tpu.memory_space<vmem>>, vector<2x96xf32>,
    %c0_7 = arith.constant 0 : index
    %c0_8 = arith.constant 0 : index
    %7 = vector.load %arg3[%c0_7, %c0_8] : memref<16x96xf32, #tpu.memory_space<vmem>>, vector<16x96xf32>
    %cst_9 = arith.constant dense<0.000000e+00> : vector<2x16xf32>
    %8 = tpu.matmul %5, %7, %cst_9 {dimension_numbers = #tpu.dot_dimension_numbers<[1], [1], [0], [0], [0, 0, 1, 0], [], []>} : vector<2x96xf32>, vector<16x96xf32>, vector<2x16xf32> -> vector<2x16xf32>
    %c0_10 = arith.constant 0 : index
    %c0_11 = arith.constant 0 : index
    %9 = vector.load %arg4[%c0_10, %c0_11] : memref<1x16xf32, #tpu.memory_space<vmem>>, vector<1x16xf32>
    %10 = vector.broadcast %9 : vector<1x16xf32> to vector<2x16xf32>
    %11 = arith.addf %8, %10 : vector<2x16xf32>
    %c0_12 = arith.constant 0 : index
    %c0_13 = arith.constant 0 : index
    %12 = vector.load %arg5[%c0_12, %c0_13] : memref<2x16xf32, #tpu.memory_space<vmem>>, vector<2x16xf32>
    tpu.vector_store %arg5[%c0_12, %c0_13], %11 {strides = array<i32>} : memref<2x16xf32, #tpu.memory_space<vmem>>, vector<2x16xf32>,
    return
  }
}

</mosaic_0001>

<llo_original>
// kernel: tpu_custom_call.1
$region0: #{tpu_custom_call.1}
  #allocation0 [shape = 'u32[]', space=smem, size = 0x4, offset = 0x4, fixed_abs, tag = 'smem constant byte address 0x4 - core index']
  #allocation1 [shape = 'u32[144,128]{1,0:T(1,128)}', space=vmem, size = 0x12000, scoped, tag = 'internal scratch']
  %s0 = inlined_call_operand.hbm [shape: bf16[2,1024], index: 0, kind: input, shape index: {}]
  %s1 = inlined_call_operand.hbm [shape: bf16[96,1024], index: 1, kind: input, shape index: {}]
  %s2 = inlined_call_operand.vmem [shape: f32[1,96], index: 2, kind: input, shape index: {}]
  %s3 = inlined_call_operand.hbm [shape: f32[16,96], index: 3, kind: input, shape index: {}]
  %s4 = inlined_call_operand.vmem [shape: f32[1,16], index: 4, kind: input, shape index: {}]
  %s5 = inlined_call_operand.hbm [shape: f32[2,16], index: 5, kind: output, shape index: {0}]
  %s6 = inlined_call_operand.hbm [shape: f32[2,96], index: 6, kind: output, shape index: {1}]
  %7 = xla_tuple %s5, %s6
  %s8 = sld [smem:[#allocation0]]
  $region50: #{tpu_custom_call.1} parent=0
    _
  %s10 = ssub.s32 1, %s8
  %s11 = scalar_select 0, %s10, %s8
  $region1: #{tpu_custom_call.1} parent=0
    #allocation2 [shape = 'u8[4096]{0}', space=vmem, size = 0x1000, scoped, tag = 'input window, operand 0, single buffered']
    #allocation3 [shape = 's32[1]{0}', space=sflag, size = 0x4, scoped, tag = 'scoped memory for tpu_custom_call.1']
    #allocation4 [shape = 's32[1]{0}', space=sflag, size = 0x4, scoped, tag = 'scoped memory for tpu_custom_call.1']
    #allocation5 [shape = 'u8[196608]{0}', space=vmem, size = 0x30000, scoped, tag = 'input window, operand 1, single buffered']
    #allocation6 [shape = 's32[1]{0}', space=sflag, size = 0x4, scoped, tag = 'scoped memory for tpu_custom_call.1']
    #allocation7 [shape = 'u8[8192]{0}', space=vmem, size = 0x2000, scoped, tag = 'input window, operand 3, single buffered']
    #allocation8 [shape = 'u8[1024]{0}', space=vmem, size = 0x400, scoped, tag = 'output window, operand 0, single buffered']
    #allocation9 [shape = 'u8[1024]{0}', space=vmem, size = 0x400, scoped, tag = 'output window, operand 1, single buffered']
    #allocation10 [shape = 's32[1]{0}', space=sflag, size = 0x4, scoped, tag = 'scoped memory for tpu_custom_call.1']
    %12 = vsyncpa [#allocation3], 0
    %13 = vsyncpa [#allocation6], 0
    %14 = vsyncpa [#allocation4], 0
    %15 = vsyncpa [#allocation10], 0
    // Predicated region
    $region2: #{tpu_custom_call.1} parent=1 // pred_check
      _
    $region3: #{tpu_custom_call.1} parent=1 // pred_check_branch
      %17 = sbr.rel (0) target = $region5
    $region4: #{tpu_custom_call.1} parent=1 // pred_region
      %s19 = ssub.s32 128, 128
      %20 = vsyncadd [#allocation3], %s19
      %s22 = sshll.u32 [#allocation2], 4
      %s23 = int_to_ptr.vmem [resolvable:$true] %s22
      %25 = dma.hbm_to_vmem [thread:$0]  %s0, 128, %s23, [#allocation3]
    $region5: #{tpu_custom_call.1} parent=1 // pred_fallthru
      _
    // Predicated region
    $region6: #{tpu_custom_call.1} parent=1 // pred_check
      _
    $region7: #{tpu_custom_call.1} parent=1 // pred_check_branch
      %27 = sbr.rel (0) target = $region9
    $region8: #{tpu_custom_call.1} parent=1 // pred_region
      %s29 = ssub.s32 6144, 6144
      %30 = vsyncadd [#allocation6], %s29
      %s31 = sshll.u32 [#allocation5], 4
      %s32 = int_to_ptr.vmem [resolvable:$true] %s31
      %37 = dma.hbm_to_vmem [thread:$0]  %s1, 6144, %s32, [#allocation6], 512, 512, 32
    $region9: #{tpu_custom_call.1} parent=1 // pred_fallthru
      _
    // Predicated region
    $region10: #{tpu_custom_call.1} parent=1 // pred_check
      _
    $region11: #{tpu_custom_call.1} parent=1 // pred_check_branch
      %39 = sbr.rel (0) target = $region13
    $region12: #{tpu_custom_call.1} parent=1 // pred_region
      _
    $region13: #{tpu_custom_call.1} parent=1 // pred_fallthru
      _
    // Predicated region
    $region14: #{tpu_custom_call.1} parent=1 // pred_check
      _
    $region15: #{tpu_custom_call.1} parent=1 // pred_check_branch
      %41 = sbr.rel (0) target = $region17
    $region16: #{tpu_custom_call.1} parent=1 // pred_region
      %s43 = ssub.s32 256, 256
      %44 = vsyncadd [#allocation6], %s43
      %s45 = sshll.u32 [#allocation7], 4
      %s46 = int_to_ptr.vmem [resolvable:$true] %s45
      %51 = dma.hbm_to_vmem [thread:$0]  %s3, 256, %s46, [#allocation6], 128, 128, 8
    $region17: #{tpu_custom_call.1} parent=1 // pred_fallthru
      _
    // Predicated region
    $region18: #{tpu_custom_call.1} parent=1 // pred_check
      _
    $region19: #{tpu_custom_call.1} parent=1 // pred_check_branch
      %53 = sbr.rel (0) target = $region21
    $region20: #{tpu_custom_call.1} parent=1 // pred_region
      _
    $region21: #{tpu_custom_call.1} parent=1 // pred_fallthru
      _
    // Predicated region
    $region22: #{tpu_custom_call.1} parent=1 // pred_check
      _
    $region23: #{tpu_custom_call.1} parent=1 // pred_check_branch
      %55 = sbr.rel (0) target = $region25
    $region24: #{tpu_custom_call.1} parent=1 // pred_region
      %56 = dma.done [#allocation3], 128
    $region25: #{tpu_custom_call.1} parent=1 // pred_fallthru
      _
    // Predicated region
    $region26: #{tpu_custom_call.1} parent=1 // pred_check
      _
    $region27: #{tpu_custom_call.1} parent=1 // pred_check_branch
      %58 = sbr.rel (0) target = $region29
    $region28: #{tpu_custom_call.1} parent=1 // pred_region
      %59 = dma.done [#allocation6], 6144
    $region29: #{tpu_custom_call.1} parent=1 // pred_fallthru
      _
    // Predicated region
    $region30: #{tpu_custom_call.1} parent=1 // pred_check
      _
    $region31: #{tpu_custom_call.1} parent=1 // pred_check_branch
      %61 = sbr.rel (0) target = $region33
    $region32: #{tpu_custom_call.1} parent=1 // pred_region
      %62 = dma.done [#allocation6], 256
    $region33: #{tpu_custom_call.1} parent=1 // pred_fallthru
      _
    %v64 = vld [vmem:[#allocation2] sm:$0xff]
    %v65 = vld [vmem:[#allocation5] sm:$0xff]
    %v66 = vld [vmem:[#allocation5 + $0x8] sm:$0xff]
    %v67 = vld [vmem:[#allocation5 + $0x10] sm:$0xff]
    %v68 = vld [vmem:[#allocation5 + $0x18] sm:$0xff]
    %v69 = vld [vmem:[#allocation5 + $0x20] sm:$0xff]
    %v70 = vld [vmem:[#allocation5 + $0x28] sm:$0xff]
    %v71 = vld [vmem:[#allocation5 + $0x30] sm:$0xff]
    %v72 = vld [vmem:[#allocation5 + $0x38] sm:$0xff]
    %v73 = vld [vmem:[#allocation5 + $0x40] sm:$0xff]
    %v74 = vld [vmem:[#allocation5 + $0x48] sm:$0xff]
    %v75 = vld [vmem:[#allocation5 + $0x50] sm:$0xff]
    %v76 = vld [vmem:[#allocation5 + $0x58] sm:$0xff]
    %v77 = vld [vmem:[#allocation5 + $0x60] sm:$0xff]
    %v78 = vld [vmem:[#allocation5 + $0x68] sm:$0xff]
    %v79 = vld [vmem:[#allocation5 + $0x70] sm:$0xff]
    %v80 = vld [vmem:[#allocation5 + $0x78] sm:$0xff]
    %v81 = vld [vmem:[#allocation5 + $0x80] sm:$0xff]
    %v82 = vld [vmem:[#allocation5 + $0x88] sm:$0xff]
    %v83 = vld [vmem:[#allocation5 + $0x90] sm:$0xff]
    %v84 = vld [vmem:[#allocation5 + $0x98] sm:$0xff]
    %v85 = vld [vmem:[#allocation5 + $0xa0] sm:$0xff]
    %v86 = vld [vmem:[#allocation5 + $0xa8] sm:$0xff]
    %v87 = vld [vmem:[#allocation5 + $0xb0] sm:$0xff]
    %v88 = vld [vmem:[#allocation5 + $0xb8] sm:$0xff]
    %v89 = vld [vmem:[#allocation5 + $0xc0] sm:$0xff]
    %v90 = vld [vmem:[#allocation5 + $0xc8] sm:$0xff]
    %v91 = vld [vmem:[#allocation5 + $0xd0] sm:$0xff]
    %v92 = vld [vmem:[#allocation5 + $0xd8] sm:$0xff]
    %v93 = vld [vmem:[#allocation5 + $0xe0] sm:$0xff]
    %v94 = vld [vmem:[#allocation5 + $0xe8] sm:$0xff]
    %v95 = vld [vmem:[#allocation5 + $0xf0] sm:$0xff]
    %v96 = vld [vmem:[#allocation5 + $0xf8] sm:$0xff]
    %v97 = vld [vmem:[#allocation5 + $0x100] sm:$0xff]
    %v98 = vld [vmem:[#allocation5 + $0x108] sm:$0xff]
    %v99 = vld [vmem:[#allocation5 + $0x110] sm:$0xff]
    %v100 = vld [vmem:[#allocation5 + $0x118] sm:$0xff]
    %v101 = vld [vmem:[#allocation5 + $0x120] sm:$0xff]
    %v102 = vld [vmem:[#allocation5 + $0x128] sm:$0xff]
    %v103 = vld [vmem:[#allocation5 + $0x130] sm:$0xff]
    %v104 = vld [vmem:[#allocation5 + $0x138] sm:$0xff]
    %v105 = vld [vmem:[#allocation5 + $0x140] sm:$0xff]
    %v106 = vld [vmem:[#allocation5 + $0x148] sm:$0xff]
    %v107 = vld [vmem:[#allocation5 + $0x150] sm:$0xff]
    %v108 = vld [vmem:[#allocation5 + $0x158] sm:$0xff]
    %v109 = vld [vmem:[#allocation5 + $0x160] sm:$0xff]
    %v110 = vld [vmem:[#allocation5 + $0x168] sm:$0xff]
    %v111 = vld [vmem:[#allocation5 + $0x170] sm:$0xff]
    %v112 = vld [vmem:[#allocation5 + $0x178] sm:$0xff]
    %v113 = vld [vmem:[%s2] sm:$0x1]
    %v115 = vlaneseq
    %v116 = vshrl.u32 %v115, 7
    %v117 = vsub.s32 0, %v116
    %v118 = vrot.slane %v113, %v117
    %v121 = vcombine.high %v64, %v64
    %v123 = vunpack.c.l.s4 1966171168
    %v124 = vunpack.c.0.s8 %v123
    %v125 = vlaneseq
    %v126 = vshrl.u32 %v125, 7
    %v127 = vsub.s32 %v124, %v126
    %v128 = vrot.slane %v64, %v127
    %v130 = vunpack.c.l.s4 1966171168
    %v131 = vunpack.c.0.s8 %v130
    %v132 = vlaneseq
    %v133 = vshrl.u32 %v132, 7
    %v134 = vsub.s32 %v131, %v133
    %v135 = vrot.slane %v121, %v134
    %v136 = vcombine.high %v128, %v128
    %v137 = vcombine.high %v135, %v135
    %v139 = vunpack.c.l.s4 1966171168
    %v140 = vunpack.c.0.s8 %v139
    %v141 = vlaneseq
    %v142 = vshrl.u32 %v141, 7
    %v143 = vsub.s32 %v140, %v142
    %v144 = vrot.slane %v128, %v143
    %v146 = vunpack.c.l.s4 1966171168
    %v147 = vunpack.c.0.s8 %v146
    %v148 = vlaneseq
    %v149 = vshrl.u32 %v148, 7
    %v150 = vsub.s32 %v147, %v149
    %v151 = vrot.slane %v135, %v150
    %v153 = vunpack.c.l.s4 1966171168
    %v154 = vunpack.c.0.s8 %v153
    %v155 = vlaneseq
    %v156 = vshrl.u32 %v155, 7
    %v157 = vsub.s32 %v154, %v156
    %v158 = vrot.slane %v136, %v157
    %v160 = vunpack.c.l.s4 1966171168
    %v161 = vunpack.c.0.s8 %v160
    %v162 = vlaneseq
    %v163 = vshrl.u32 %v162, 7
    %v164 = vsub.s32 %v161, %v163
    %v165 = vrot.slane %v137, %v164
    %v166 = vcombine.high %v144, %v144
    %v167 = vcombine.high %v151, %v151
    %v168 = vcombine.high %v158, %v158
    %v169 = vcombine.high %v165, %v165
    %v226 = vunpack.c.l.b16 %v65
    %v227 = vunpack.c.h.b16 %v65
    %v228 = vunpack.c.l.b16 %v66
    %v229 = vunpack.c.h.b16 %v66
    %v230 = vunpack.c.l.b16 %v67
    %v231 = vunpack.c.h.b16 %v67
    %v232 = vunpack.c.l.b16 %v68
    %v233 = vunpack.c.h.b16 %v68
    %v234 = vunpack.c.l.b16 %v69
    %v235 = vunpack.c.h.b16 %v69
    %v236 = vunpack.c.l.b16 %v70
    %v237 = vunpack.c.h.b16 %v70
    %v238 = vunpack.c.l.b16 %v71
    %v239 = vunpack.c.h.b16 %v71
    %v240 = vunpack.c.l.b16 %v72
    %v241 = vunpack.c.h.b16 %v72
    %v242 = vunpack.c.l.b16 %v73
    %v243 = vunpack.c.h.b16 %v73
    %v244 = vunpack.c.l.b16 %v74
    %v245 = vunpack.c.h.b16 %v74
    %v246 = vunpack.c.l.b16 %v75
    %v247 = vunpack.c.h.b16 %v75
    %v248 = vunpack.c.l.b16 %v76
    %v249 = vunpack.c.h.b16 %v76
    %v250 = vunpack.c.l.b16 %v77
    %v251 = vunpack.c.h.b16 %v77
    %v252 = vunpack.c.l.b16 %v78
    %v253 = vunpack.c.h.b16 %v78
    %v254 = vunpack.c.l.b16 %v79
    %v255 = vunpack.c.h.b16 %v79
    %v256 = vunpack.c.l.b16 %v80
    %v257 = vunpack.c.h.b16 %v80
    %v258 = vunpack.c.l.b16 %v81
    %v259 = vunpack.c.h.b16 %v81
    %v260 = vunpack.c.l.b16 %v82
    %v261 = vunpack.c.h.b16 %v82
    %v262 = vunpack.c.l.b16 %v83
    %v263 = vunpack.c.h.b16 %v83
    %v264 = vunpack.c.l.b16 %v84
    %v265 = vunpack.c.h.b16 %v84
    %v266 = vunpack.c.l.b16 %v85
    %v267 = vunpack.c.h.b16 %v85
    %v268 = vunpack.c.l.b16 %v86
    %v269 = vunpack.c.h.b16 %v86
    %v270 = vunpack.c.l.b16 %v87
    %v271 = vunpack.c.h.b16 %v87
    %v272 = vunpack.c.l.b16 %v88
    %v273 = vunpack.c.h.b16 %v88
    %v274 = vunpack.c.l.b16 %v89
    %v275 = vunpack.c.h.b16 %v89
    %v276 = vunpack.c.l.b16 %v90
    %v277 = vunpack.c.h.b16 %v90
    %v278 = vunpack.c.l.b16 %v91
    %v279 = vunpack.c.h.b16 %v91
    %v280 = vunpack.c.l.b16 %v92
    %v281 = vunpack.c.h.b16 %v92
    %v282 = vunpack.c.l.b16 %v93
    %v283 = vunpack.c.h.b16 %v93
    %v284 = vunpack.c.l.b16 %v94
    %v285 = vunpack.c.h.b16 %v94
    %v286 = vunpack.c.l.b16 %v95
    %v287 = vunpack.c.h.b16 %v95
    %v288 = vunpack.c.l.b16 %v96
    %v289 = vunpack.c.h.b16 %v96
    %v290 = vunpack.c.l.b16 %v97
    %v291 = vunpack.c.h.b16 %v97
    %v292 = vunpack.c.l.b16 %v98
    %v293 = vunpack.c.h.b16 %v98
    %v294 = vunpack.c.l.b16 %v99
    %v295 = vunpack.c.h.b16 %v99
    %v296 = vunpack.c.l.b16 %v100
    %v297 = vunpack.c.h.b16 %v100
    %v298 = vunpack.c.l.b16 %v101
    %v299 = vunpack.c.h.b16 %v101
    %v300 = vunpack.c.l.b16 %v102
    %v301 = vunpack.c.h.b16 %v102
    %v302 = vunpack.c.l.b16 %v103
    %v303 = vunpack.c.h.b16 %v103
    %v304 = vunpack.c.l.b16 %v104
    %v305 = vunpack.c.h.b16 %v104
    %v306 = vunpack.c.l.b16 %v105
    %v307 = vunpack.c.h.b16 %v105
    %v308 = vunpack.c.l.b16 %v106
    %v309 = vunpack.c.h.b16 %v106
    %v310 = vunpack.c.l.b16 %v107
    %v311 = vunpack.c.h.b16 %v107
    %v312 = vunpack.c.l.b16 %v108
    %v313 = vunpack.c.h.b16 %v108
    %v314 = vunpack.c.l.b16 %v109
    %v315 = vunpack.c.h.b16 %v109
    %v316 = vunpack.c.l.b16 %v110
    %v317 = vunpack.c.h.b16 %v110
    %v318 = vunpack.c.l.b16 %v111
    %v319 = vunpack.c.h.b16 %v111
    %v320 = vunpack.c.l.b16 %v112
    %v321 = vunpack.c.h.b16 %v112
    %v322 = vpack.c.b16 %v234, %v226
    %v323 = vpack.c.b16 %v235, %v227
    %v324 = vpack.c.b16 %v236, %v228
    %v325 = vpack.c.b16 %v237, %v229
    %v326 = vpack.c.b16 %v238, %v230
    %v327 = vpack.c.b16 %v239, %v231
    %v328 = vpack.c.b16 %v240, %v232
    %v329 = vpack.c.b16 %v241, %v233
    %v330 = vpack.c.b16 %v250, %v242
    %v331 = vpack.c.b16 %v251, %v243
    %v332 = vpack.c.b16 %v252, %v244
    %v333 = vpack.c.b16 %v253, %v245
    %v334 = vpack.c.b16 %v254, %v246
    %v335 = vpack.c.b16 %v255, %v247
    %v336 = vpack.c.b16 %v256, %v248
    %v337 = vpack.c.b16 %v257, %v249
    %v338 = vpack.c.b16 %v266, %v258
    %v339 = vpack.c.b16 %v267, %v259
    %v340 = vpack.c.b16 %v268, %v260
    %v341 = vpack.c.b16 %v269, %v261
    %v342 = vpack.c.b16 %v270, %v262
    %v343 = vpack.c.b16 %v271, %v263
    %v344 = vpack.c.b16 %v272, %v264
    %v345 = vpack.c.b16 %v273, %v265
    %v346 = vpack.c.b16 %v282, %v274
    %v347 = vpack.c.b16 %v283, %v275
    %v348 = vpack.c.b16 %v284, %v276
    %v349 = vpack.c.b16 %v285, %v277
    %v350 = vpack.c.b16 %v286, %v278
    %v351 = vpack.c.b16 %v287, %v279
    %v352 = vpack.c.b16 %v288, %v280
    %v353 = vpack.c.b16 %v289, %v281
    %v354 = vpack.c.b16 %v298, %v290
    %v355 = vpack.c.b16 %v299, %v291
    %v356 = vpack.c.b16 %v300, %v292
    %v357 = vpack.c.b16 %v301, %v293
    %v358 = vpack.c.b16 %v302, %v294
    %v359 = vpack.c.b16 %v303, %v295
    %v360 = vpack.c.b16 %v304, %v296
    %v361 = vpack.c.b16 %v305, %v297
    %v362 = vpack.c.b16 %v314, %v306
    %v363 = vpack.c.b16 %v315, %v307
    %v364 = vpack.c.b16 %v316, %v308
    %v365 = vpack.c.b16 %v317, %v309
    %v366 = vpack.c.b16 %v318, %v310
    %v367 = vpack.c.b16 %v319, %v311
    %v368 = vpack.c.b16 %v320, %v312
    %v369 = vpack.c.b16 %v321, %v313
    %418 = vmatprep.subr.bf16.mxu0 %v323
    %419 = vmatpush1.bf16.xpose.msra.mxu0 %v322
    %420 = vmatprep.subr.bf16.mxu0 %v331
    %421 = vmatpush1.bf16.xpose.msra.mxu0 %v330
    %422 = vmatprep.subr.bf16.mxu0 %v339
    %423 = vmatpush1.bf16.xpose.msra.mxu0 %v338
    %424 = vmatprep.subr.bf16.mxu0 %v347
    %425 = vmatpush1.bf16.xpose.msra.mxu0 %v346
    %426 = vmatprep.subr.bf16.mxu0 %v355
    %427 = vmatpush1.bf16.xpose.msra.mxu0 %v354
    %428 = vmatprep.subr.bf16.mxu0 %v363
    %429 = vmatpush1.bf16.xpose.msra.mxu0 %v362
    %430 = vmatprep.subr.bf16.mxu0 0
    %431 = vmatpush1.bf16.xpose.msra.mxu0 0
    %432 = vmatprep.subr.bf16.mxu0 0
    %433 = vmatpush1.bf16.xpose.msra.mxu0 0
    %434 = vmatprep.subr.bf16.mxu0 0
    %435 = vmatpush1.bf16.xpose.msra.mxu0 0
    %436 = vmatprep.subr.bf16.mxu0 0
    %437 = vmatpush1.bf16.xpose.msra.mxu0 0
    %438 = vmatprep.subr.bf16.mxu0 0
    %439 = vmatpush1.bf16.xpose.msra.mxu0 0
    %440 = vmatprep.subr.bf16.mxu0 0
    %441 = vmatpush1.bf16.xpose.msra.mxu0 0
    %442 = vmatprep.subr.bf16.mxu0 0
    %443 = vmatpush1.bf16.xpose.msra.mxu0 0
    %444 = vmatprep.subr.bf16.mxu0 0
    %445 = vmatpush1.bf16.xpose.msra.mxu0 0
    %446 = vmatprep.subr.bf16.mxu0 0
    %447 = vmatpush1.bf16.xpose.msra.mxu0 0
    %448 = vmatprep.subr.bf16.mxu0 0
    %449 = vmatpush1.bf16.xpose.msra.mxu0 0
    %450 = vmatprep.mubr.bf16.mxu0 %v158
    %451 = vmatmul.mubr.bf16.gmra.mrb[0].mxu0 %v144
    %v452 = vpop.f32.mrb[0].mxu0
    %v453 = vadd.f32 %v118, %v452
    %v454 = vpop.f32.mrb[0].mxu0
    %v455 = vpop.f32.mrb[0].mxu0
    %v456 = vpop.f32.mrb[0].mxu0
    %457 = vdwg.mxu0
    %458 = vmatprep.subr.bf16.mxu0 %v325
    %459 = vmatpush1.bf16.xpose.msra.mxu0 %v324
    %460 = vmatprep.subr.bf16.mxu0 %v333
    %461 = vmatpush1.bf16.xpose.msra.mxu0 %v332
    %462 = vmatprep.subr.bf16.mxu0 %v341
    %463 = vmatpush1.bf16.xpose.msra.mxu0 %v340
    %464 = vmatprep.subr.bf16.mxu0 %v349
    %465 = vmatpush1.bf16.xpose.msra.mxu0 %v348
    %466 = vmatprep.subr.bf16.mxu0 %v357
    %467 = vmatpush1.bf16.xpose.msra.mxu0 %v356
    %468 = vmatprep.subr.bf16.mxu0 %v365
    %469 = vmatpush1.bf16.xpose.msra.mxu0 %v364
    %470 = vmatprep.subr.bf16.mxu0 0
    %471 = vmatpush1.bf16.xpose.msra.mxu0 0
    %472 = vmatprep.subr.bf16.mxu0 0
    %473 = vmatpush1.bf16.xpose.msra.mxu0 0
    %474 = vmatprep.subr.bf16.mxu0 0
    %475 = vmatpush1.bf16.xpose.msra.mxu0 0
    %476 = vmatprep.subr.bf16.mxu0 0
    %477 = vmatpush1.bf16.xpose.msra.mxu0 0
    %478 = vmatprep.subr.bf16.mxu0 0
    %479 = vmatpush1.bf16.xpose.msra.mxu0 0
    %480 = vmatprep.subr.bf16.mxu0 0
    %481 = vmatpush1.bf16.xpose.msra.mxu0 0
    %482 = vmatprep.subr.bf16.mxu0 0
    %483 = vmatpush1.bf16.xpose.msra.mxu0 0
    %484 = vmatprep.subr.bf16.mxu0 0
    %485 = vmatpush1.bf16.xpose.msra.mxu0 0
    %486 = vmatprep.subr.bf16.mxu0 0
    %487 = vmatpush1.bf16.xpose.msra.mxu0 0
    %488 = vmatprep.subr.bf16.mxu0 0
    %489 = vmatpush1.bf16.xpose.msra.mxu0 0
    %490 = vmatprep.mubr.bf16.mxu0 %v168
    %491 = vmatmul.mubr.bf16.gmra.mrb[0].mxu0 %v166
    %v492 = vpop.f32.mrb[0].mxu0
    %v493 = vadd.f32 %v453, %v492
    %v494 = vpop.f32.mrb[0].mxu0
    %v495 = vpop.f32.mrb[0].mxu0
    %v496 = vpop.f32.mrb[0].mxu0
    %497 = vdwg.mxu0
    %498 = vmatprep.subr.bf16.mxu0 %v327
    %499 = vmatpush1.bf16.xpose.msra.mxu0 %v326
    %500 = vmatprep.subr.bf16.mxu0 %v335
    %501 = vmatpush1.bf16.xpose.msra.mxu0 %v334
    %502 = vmatprep.subr.bf16.mxu0 %v343
    %503 = vmatpush1.bf16.xpose.msra.mxu0 %v342
    %504 = vmatprep.subr.bf16.mxu0 %v351
    %505 = vmatpush1.bf16.xpose.msra.mxu0 %v350
    %506 = vmatprep.subr.bf16.mxu0 %v359
    %507 = vmatpush1.bf16.xpose.msra.mxu0 %v358
    %508 = vmatprep.subr.bf16.mxu0 %v367
    %509 = vmatpush1.bf16.xpose.msra.mxu0 %v366
    %510 = vmatprep.subr.bf16.mxu0 0
    %511 = vmatpush1.bf16.xpose.msra.mxu0 0
    %512 = vmatprep.subr.bf16.mxu0 0
    %513 = vmatpush1.bf16.xpose.msra.mxu0 0
    %514 = vmatprep.subr.bf16.mxu0 0
    %515 = vmatpush1.bf16.xpose.msra.mxu0 0
    %516 = vmatprep.subr.bf16.mxu0 0
    %517 = vmatpush1.bf16.xpose.msra.mxu0 0
    %518 = vmatprep.subr.bf16.mxu0 0
    %519 = vmatpush1.bf16.xpose.msra.mxu0 0
    %520 = vmatprep.subr.bf16.mxu0 0
    %521 = vmatpush1.bf16.xpose.msra.mxu0 0
    %522 = vmatprep.subr.bf16.mxu0 0
    %523 = vmatpush1.bf16.xpose.msra.mxu0 0
    %524 = vmatprep.subr.bf16.mxu0 0
    %525 = vmatpush1.bf16.xpose.msra.mxu0 0
    %526 = vmatprep.subr.bf16.mxu0 0
    %527 = vmatpush1.bf16.xpose.msra.mxu0 0
    %528 = vmatprep.subr.bf16.mxu0 0
    %529 = vmatpush1.bf16.xpose.msra.mxu0 0
    %530 = vmatprep.mubr.bf16.mxu0 %v165
    %531 = vmatmul.mubr.bf16.gmra.mrb[0].mxu0 %v151
    %v532 = vpop.f32.mrb[0].mxu0
    %v533 = vadd.f32 %v493, %v532
    %v534 = vpop.f32.mrb[0].mxu0
    %v535 = vpop.f32.mrb[0].mxu0
    %v536 = vpop.f32.mrb[0].mxu0
    %537 = vdwg.mxu0
    %538 = vmatprep.subr.bf16.mxu0 %v329
    %539 = vmatpush1.bf16.xpose.msra.mxu0 %v328
    %540 = vmatprep.subr.bf16.mxu0 %v337
    %541 = vmatpush1.bf16.xpose.msra.mxu0 %v336
    %542 = vmatprep.subr.bf16.mxu0 %v345
    %543 = vmatpush1.bf16.xpose.msra.mxu0 %v344
    %544 = vmatprep.subr.bf16.mxu0 %v353
    %545 = vmatpush1.bf16.xpose.msra.mxu0 %v352
    %546 = vmatprep.subr.bf16.mxu0 %v361
    %547 = vmatpush1.bf16.xpose.msra.mxu0 %v360
    %548 = vmatprep.subr.bf16.mxu0 %v369
    %549 = vmatpush1.bf16.xpose.msra.mxu0 %v368
    %550 = vmatprep.subr.bf16.mxu0 0
    %551 = vmatpush1.bf16.xpose.msra.mxu0 0
    %552 = vmatprep.subr.bf16.mxu0 0
    %553 = vmatpush1.bf16.xpose.msra.mxu0 0
    %554 = vmatprep.subr.bf16.mxu0 0
    %555 = vmatpush1.bf16.xpose.msra.mxu0 0
    %556 = vmatprep.subr.bf16.mxu0 0
    %557 = vmatpush1.bf16.xpose.msra.mxu0 0
    %558 = vmatprep.subr.bf16.mxu0 0
    %559 = vmatpush1.bf16.xpose.msra.mxu0 0
    %560 = vmatprep.subr.bf16.mxu0 0
    %561 = vmatpush1.bf16.xpose.msra.mxu0 0
    %562 = vmatprep.subr.bf16.mxu0 0
    %563 = vmatpush1.bf16.xpose.msra.mxu0 0
    %564 = vmatprep.subr.bf16.mxu0 0
    %565 = vmatpush1.bf16.xpose.msra.mxu0 0
    %566 = vmatprep.subr.bf16.mxu0 0
    %567 = vmatpush1.bf16.xpose.msra.mxu0 0
    %568 = vmatprep.subr.bf16.mxu0 0
    %569 = vmatpush1.bf16.xpose.msra.mxu0 0
    %570 = vmatprep.mubr.bf16.mxu0 %v169
    %571 = vmatmul.mubr.bf16.gmra.mrb[0].mxu0 %v167
    %v572 = vpop.f32.mrb[0].mxu0
    %v573 = vadd.f32 %v533, %v572
    %v574 = vpop.f32.mrb[0].mxu0
    %v575 = vpop.f32.mrb[0].mxu0
    %v576 = vpop.f32.mrb[0].mxu0
    %577 = vdwg.mxu0
    %vm578 = vcmask 779264
    %579 = vst.msk [vmem:[#allocation9] sm:$0x3] %vm578, %v573
    %v580 = vld [vmem:[#allocation7] sm:$0xff]
    %v581 = vld [vmem:[#allocation7 + $0x8] sm:$0xff]
    %v582 = vld [vmem:[%s4] sm:$0x1]
    %v584 = vlaneseq
    %v585 = vshrl.u32 %v584, 7
    %v586 = vsub.s32 0, %v585
    %v587 = vrot.slane %v582, %v586
    %vm589 = vcmask 785408
    %v591 = vsel %vm589, %v573, 0
    %v594 = vsel %vm589, %v580, 0
    %v597 = vsel %vm589, %v581, 0
    %599 = vmatprep.subr.mxu0 0.0
    %600 = vmatpush1.xpose.msra.mxu0 %v594
    %601 = vmatprep.subr.mxu0 0.0
    %602 = vmatpush1.xpose.msra.mxu0 %v597
    %603 = vmatprep.subr.mxu0 0.0
    %604 = vmatpush1.xpose.msra.mxu0 0.0
    %605 = vmatprep.subr.mxu0 0.0
    %606 = vmatpush1.xpose.msra.mxu0 0.0
    %607 = vmatprep.subr.mxu0 0.0
    %608 = vmatpush1.xpose.msra.mxu0 0.0
    %609 = vmatprep.subr.mxu0 0.0
    %610 = vmatpush1.xpose.msra.mxu0 0.0
    %611 = vmatprep.subr.mxu0 0.0
    %612 = vmatpush1.xpose.msra.mxu0 0.0
    %613 = vmatprep.subr.mxu0 0.0
    %614 = vmatpush1.xpose.msra.mxu0 0.0
    %615 = vmatprep.subr.mxu0 0.0
    %616 = vmatpush1.xpose.msra.mxu0 0.0
    %617 = vmatprep.subr.mxu0 0.0
    %618 = vmatpush1.xpose.msra.mxu0 0.0
    %619 = vmatprep.subr.mxu0 0.0
    %620 = vmatpush1.xpose.msra.mxu0 0.0
    %621 = vmatprep.subr.mxu0 0.0
    %622 = vmatpush1.xpose.msra.mxu0 0.0
    %623 = vmatprep.subr.mxu0 0.0
    %624 = vmatpush1.xpose.msra.mxu0 0.0
    %625 = vmatprep.subr.mxu0 0.0
    %626 = vmatpush1.xpose.msra.mxu0 0.0
    %627 = vmatprep.subr.mxu0 0.0
    %628 = vmatpush1.xpose.msra.mxu0 0.0
    %629 = vmatprep.subr.mxu0 0.0
    %630 = vmatpush1.xpose.msra.mxu0 0.0
    %631 = vmatprep.subr.mxu0 0.0
    %632 = vmatpush1.xpose.msra.mxu0 0.0
    %633 = vmatprep.subr.mxu0 0.0
    %634 = vmatpush1.xpose.msra.mxu0 0.0
    %635 = vmatprep.subr.mxu0 0.0
    %636 = vmatpush1.xpose.msra.mxu0 0.0
    %637 = vmatprep.subr.mxu0 0.0
    %638 = vmatpush1.xpose.msra.mxu0 0.0
    %639 = vmatprep.subr.mxu0 0.0
    %640 = vmatpush1.xpose.msra.mxu0 0.0
    %641 = vmatprep.subr.mxu0 0.0
    %642 = vmatpush1.xpose.msra.mxu0 0.0
    %643 = vmatprep.subr.mxu0 0.0
    %644 = vmatpush1.xpose.msra.mxu0 0.0
    %645 = vmatprep.subr.mxu0 0.0
    %646 = vmatpush1.xpose.msra.mxu0 0.0
    %647 = vmatprep.subr.mxu0 0.0
    %648 = vmatpush1.xpose.msra.mxu0 0.0
    %649 = vmatprep.subr.mxu0 0.0
    %650 = vmatpush1.xpose.msra.mxu0 0.0
    %651 = vmatprep.subr.mxu0 0.0
    %652 = vmatpush1.xpose.msra.mxu0 0.0
    %653 = vmatprep.subr.mxu0 0.0
    %654 = vmatpush1.xpose.msra.mxu0 0.0
    %655 = vmatprep.subr.mxu0 0.0
    %656 = vmatpush1.xpose.msra.mxu0 0.0
    %657 = vmatprep.subr.mxu0 0.0
    %658 = vmatpush1.xpose.msra.mxu0 0.0
    %659 = vmatprep.subr.mxu0 0.0
    %660 = vmatpush1.xpose.msra.mxu0 0.0
    %661 = vmatprep.subr.mxu0 0.0
    %662 = vmatpush1.xpose.msra.mxu0 0.0
    %663 = vmatprep.mubr.f32.mxu0 0.0
    %664 = vmatmul.mubr.f32.gmra.mrb[0].mxu0 %v591
    %v665 = vpop.f32.mrb[0].mxu0
    %v666 = vadd.f32 %v587, %v665
    %v667 = vpop.f32.mrb[0].mxu0
    %668 = vdwg.mxu0
    %vm669 = vcmask 123904
    %670 = vst.msk [vmem:[#allocation8] sm:$0x3] %vm669, %v666
    // Predicated region
    $region34: #{tpu_custom_call.1} parent=1 // pred_check
      _
    $region35: #{tpu_custom_call.1} parent=1 // pred_check_branch
      %672 = sbr.rel (0) target = $region37
    $region36: #{tpu_custom_call.1} parent=1 // pred_region
      %s674 = ssub.s32 32, 32
      %675 = vsyncadd [#allocation4], %s674
      %s677 = sshll.u32 [#allocation8], 4
      %s678 = int_to_ptr.vmem [resolvable:$true] %s677
      %680 = dma.vmem_to_hbm [thread:$0]  %s678, 32, %s5, [#allocation4]
    $region37: #{tpu_custom_call.1} parent=1 // pred_fallthru
      _
    // Predicated region
    $region38: #{tpu_custom_call.1} parent=1 // pred_check
      _
    $region39: #{tpu_custom_call.1} parent=1 // pred_check_branch
      %682 = sbr.rel (0) target = $region41
    $region40: #{tpu_custom_call.1} parent=1 // pred_region
      %s684 = ssub.s32 32, 32
      %685 = vsyncadd [#allocation10], %s684
      %s687 = sshll.u32 [#allocation9], 4
      %s688 = int_to_ptr.vmem [resolvable:$true] %s687
      %690 = dma.vmem_to_hbm [thread:$0]  %s688, 32, %s6, [#allocation10]
    $region41: #{tpu_custom_call.1} parent=1 // pred_fallthru
      _
    // Predicated region
    $region42: #{tpu_custom_call.1} parent=1 // pred_check
      _
    $region43: #{tpu_custom_call.1} parent=1 // pred_check_branch
      %692 = sbr.rel (0) target = $region45
    $region44: #{tpu_custom_call.1} parent=1 // pred_region
      %693 = dma.done [#allocation4], 32
    $region45: #{tpu_custom_call.1} parent=1 // pred_fallthru
      _
    // Predicated region
    $region46: #{tpu_custom_call.1} parent=1 // pred_check
      _
    $region47: #{tpu_custom_call.1} parent=1 // pred_check_branch
      %695 = sbr.rel (0) target = $region49
    $region48: #{tpu_custom_call.1} parent=1 // pred_region
      %696 = dma.done [#allocation10], 32
    $region49: #{tpu_custom_call.1} parent=1 // pred_fallthru
      _
    %697 = vsyncpa [#allocation3], 1
    %698 = vsyncpa [#allocation6], 1
    %699 = vsyncpa [#allocation4], 1
    %700 = vsyncpa [#allocation10], 1

</llo_original>
